<compile_context>
chip_gen: v7x
topology: tpu7x:2x2x1
jax: 0.10.0
libtpu: 0.0.40
codegen_flags: <defaults>
</compile_context>

<pallas_src>
import functools

import jax
import jax.numpy as jnp
from jax.experimental import pallas as pl
from jax.experimental.pallas import tpu as pltpu


def _round_up(a: int, b: int) -> int:
    return ((a + b - 1) // b) * b


def _rmsnorm_kernel(x_ref, w_ref, o_ref, *, eps, inv_h):
    # x_ref: (block_rows, H) row tile; w_ref: (1, H) resident weight.
    x = x_ref[...].astype(jnp.float32)
    w = w_ref[...].astype(jnp.float32)                 # (1, H)
    ss = jnp.sum(x * x, axis=-1, keepdims=True)        # lane reduce (XLU)
    inv = jax.lax.rsqrt(ss * inv_h + eps)              # EUP rsqrt
    o_ref[...] = (x * inv * w).astype(o_ref.dtype)


def _rmsnorm(x, weight, *, eps=None, block_rows=None):
    """RMSNorm over the last dim of `x` with learnable `weight` (shape (H,))."""
    dtype = x.dtype
    H = x.shape[-1]
    orig_shape = x.shape

    if eps is None:
        # PyTorch nn.RMSNorm(eps=None) uses torch.finfo(input.dtype).eps
        eps = float(jnp.finfo(dtype).eps)

    # Reshape of a contiguous array to (-1, H) is a bitcast (no HBM pass).
    x2d = x if x.ndim == 2 else x.reshape(-1, H)
    R = x2d.shape[0]

    itemsize = jnp.dtype(dtype).itemsize
    sub = {4: 8, 2: 16, 1: 32}.get(itemsize, 8)        # sublane packing per dtype

    if block_rows is None:
        # ~2 MiB x blocks: big enough to amortize ~0.35 us/step overhead on
        # v6e/v7x HBM, still fine for v5e.
        target_block_bytes = 2 << 20
        br = max(sub, (target_block_bytes // max(1, H * itemsize)) // sub * sub)
        # Keep >= ~8 grid steps on large inputs so v7x's two TensorCores each
        # see several pipelined steps under dimension_semantics=("parallel",).
        min_steps = 8
        if R > min_steps * sub:
            br = min(br, max(sub, (R // min_steps) // sub * sub))
        # Don't overshoot tiny inputs.
        br = min(br, _round_up(max(R, 1), sub))
    else:
        br = _round_up(max(block_rows, 1), sub)
    br = max(br, sub)

    n_blocks = pl.cdiv(max(R, 1), br)

    # VMEM budget: double-buffered in + out blocks, plus the f32 upcast
    # temporaries the body materializes (x upcast + product), plus the
    # resident weight; 2x headroom, clamped to [16 MiB, 64 MiB].
    block_bytes = br * H * itemsize
    f32_temp_bytes = 2 * br * H * 4
    est_vmem = 2 * 2 * block_bytes + f32_temp_bytes + 2 * H * 4
    vmem_limit = int(min(64 * 1024 * 1024, max(2 * est_vmem, 16 * 1024 * 1024)))

    kernel = functools.partial(_rmsnorm_kernel, eps=eps, inv_h=1.0 / H)

    out2d = pl.pallas_call(
        kernel,
        out_shape=jax.ShapeDtypeStruct((R, H), dtype),
        grid=(n_blocks,),
        in_specs=[
            # Last block dim == full H: legal for any H, no zero padding.
            # (For H far below 128 this leaves lanes idle; HBM traffic stays
            # exact, which dominates for this mem-bound kernel.)
            pl.BlockSpec((br, H), lambda i: (i, 0)),
            pl.BlockSpec((1, H), lambda i: (0, 0)),     # resident weight
        ],
        out_specs=pl.BlockSpec((br, H), lambda i: (i, 0)),
        compiler_params=pltpu.CompilerParams(
            dimension_semantics=("parallel",),
            vmem_limit_bytes=vmem_limit,
        ),
    )(x2d, weight.reshape(1, H))

    return out2d if x.ndim == 2 else out2d.reshape(orig_shape)


def rmsnorm_graph_forward(node_features, edge_features, node_weight, edge_weight,
                          *, eps=None, block_rows=None):
    """Matches RMSNormGraph.forward: independent RMSNorm on nodes and edges."""
    assert node_features.shape[-1] == edge_features.shape[-1], \
        "node/edge hidden size must match"
    node_out = _rmsnorm(node_features, node_weight, eps=eps, block_rows=block_rows)
    edge_out = _rmsnorm(edge_features, edge_weight, eps=eps, block_rows=block_rows)
    return node_out, edge_out


def _rmsnorm_ref(x, w, eps):
    xf = x.astype(jnp.float32)
    inv = jax.lax.rsqrt(jnp.mean(xf * xf, axis=-1, keepdims=True) + eps)
    return (xf * inv * w.astype(jnp.float32)).astype(x.dtype)


if __name__ == "__main__":
    hidden = 32
    n_nodes = 8
    n_edges = 16

    key = jax.random.PRNGKey(0)
    k_node, k_edge, k_wn, k_we = jax.random.split(key, 4)

    node_features = jax.random.normal(k_node, (n_nodes, hidden), dtype=jnp.float32)
    edge_features = jax.random.normal(k_edge, (n_edges, hidden), dtype=jnp.float32)

    # PyTorch default init is ones; perturb slightly so the affine scale is
    # actually exercised.
    node_weight = jnp.ones((hidden,), jnp.float32) + 0.01 * jax.random.normal(
        k_wn, (hidden,), dtype=jnp.float32)
    edge_weight = jnp.ones((hidden,), jnp.float32) + 0.01 * jax.random.normal(
        k_we, (hidden,), dtype=jnp.float32)

    eps = float(jnp.finfo(jnp.float32).eps)

    node_out, edge_out = rmsnorm_graph_forward(
        node_features, edge_features, node_weight, edge_weight)
    jax.block_until_ready((node_out, edge_out))

    node_ref = _rmsnorm_ref(node_features, node_weight, eps)
    edge_ref = _rmsnorm_ref(edge_features, edge_weight, eps)
    assert node_out.shape == node_ref.shape and edge_out.shape == edge_ref.shape
    assert jnp.allclose(node_out, node_ref, atol=1e-5, rtol=1e-5)
    assert jnp.allclose(edge_out, edge_ref, atol=1e-5, rtol=1e-5)

    # Ragged (non-multiple-of-8) row counts: exercises masked tail blocks.
    k_n2, k_e2 = jax.random.split(k_node, 2)
    nf2 = jax.random.normal(k_n2, (13, hidden), dtype=jnp.float32)
    ef2 = jax.random.normal(k_e2, (27, hidden), dtype=jnp.float32)
    no2, eo2 = rmsnorm_graph_forward(nf2, ef2, node_weight, edge_weight)
    jax.block_until_ready((no2, eo2))
    assert jnp.allclose(no2, _rmsnorm_ref(nf2, node_weight, eps), atol=1e-5, rtol=1e-5)
    assert jnp.allclose(eo2, _rmsnorm_ref(ef2, edge_weight, eps), atol=1e-5, rtol=1e-5)

    # Leading batch dims: exercises the (bitcast) reshape path.
    nf3 = jax.random.normal(k_n2, (2, 5, hidden), dtype=jnp.float32)
    ef3 = jax.random.normal(k_e2, (3, 7, hidden), dtype=jnp.float32)
    no3, eo3 = rmsnorm_graph_forward(nf3, ef3, node_weight, edge_weight)
    jax.block_until_ready((no3, eo3))
    assert jnp.allclose(no3, _rmsnorm_ref(nf3, node_weight, eps), atol=1e-5, rtol=1e-5)
    assert jnp.allclose(eo3, _rmsnorm_ref(ef3, edge_weight, eps), atol=1e-5, rtol=1e-5)

    print("KERNEL_OK")
</pallas_src>

<mosaic_0001>
module attributes {stable_mosaic.version = 11 : i64} {
  func.func @_rmsnorm_kernel(%arg0: i32, %arg1: memref<8x32xf32, #tpu.memory_space<vmem>>, %arg2: memref<1x32xf32, #tpu.memory_space<vmem>>, %arg3: memref<8x32xf32, #tpu.memory_space<vmem>>) attributes {dimension_semantics = [#tpu.dimension_semantics<parallel>], iteration_bounds = array<i64: 1>, scalar_prefetch = 0 : i64, scratch_operands = 0 : i64, tpu.core_type = #tpu.core_type<tc>, window_params = [{transform_indices = @transform_0, window_bounds = array<i64: 8, 32>}, {pipeline_mode = #tpu.pipeline_mode<synchronous>, transform_indices = @transform_1, window_bounds = array<i64: 1, 32>}, {transform_indices = @transform_2, window_bounds = array<i64: 8, 32>}]} {
    %c0 = arith.constant 0 : index
    %c0_0 = arith.constant 0 : index
    %0 = vector.load %arg1[%c0, %c0_0] : memref<8x32xf32, #tpu.memory_space<vmem>>, vector<8x32xf32>
    %c0_1 = arith.constant 0 : index
    %c0_2 = arith.constant 0 : index
    %1 = vector.load %arg2[%c0_1, %c0_2] : memref<1x32xf32, #tpu.memory_space<vmem>>, vector<1x32xf32>
    %2 = arith.mulf %0, %0 : vector<8x32xf32>
    %cst = arith.constant dense<0.000000e+00> : vector<8xf32>
    %3 = vector.multi_reduction <add>, %2, %cst [1] : vector<8x32xf32> to vector<8xf32>
    %4 = vector.shape_cast %3 : vector<8xf32> to vector<8x1xf32>
    %cst_3 = arith.constant 3.125000e-02 : f32
    %5 = vector.broadcast %cst_3 : f32 to vector<8x1xf32>
    %6 = arith.mulf %4, %5 : vector<8x1xf32>
    %cst_4 = arith.constant 1.1920929E-7 : f32
    %7 = vector.broadcast %cst_4 : f32 to vector<8x1xf32>
    %8 = arith.addf %6, %7 : vector<8x1xf32>
    %9 = math.rsqrt %8 : vector<8x1xf32>
    %10 = vector.broadcast %9 : vector<8x1xf32> to vector<8x32xf32>
    %11 = arith.mulf %0, %10 : vector<8x32xf32>
    %12 = vector.broadcast %1 : vector<1x32xf32> to vector<8x32xf32>
    %13 = arith.mulf %11, %12 : vector<8x32xf32>
    %c0_5 = arith.constant 0 : index
    %c0_6 = arith.constant 0 : index
    %14 = vector.load %arg3[%c0_5, %c0_6] : memref<8x32xf32, #tpu.memory_space<vmem>>, vector<8x32xf32>
    tpu.vector_store %arg3[%c0_5, %c0_6], %13 {strides = array<i32>} : memref<8x32xf32, #tpu.memory_space<vmem>>, vector<8x32xf32>,
    return
  }
  func.func @transform_0(%arg0: i32) -> (i32, i32) {
    %c0_i32 = arith.constant 0 : i32
    %c0_i32_0 = arith.constant 0 : i32
    return %arg0, %c0_i32 : i32, i32
  }
  func.func @transform_1(%arg0: i32) -> (i32, i32) {
    %c0_i32 = arith.constant 0 : i32
    %c0_i32_0 = arith.constant 0 : i32
    %c0_i32_1 = arith.constant 0 : i32
    return %c0_i32, %c0_i32_0 : i32, i32
  }
  func.func @transform_2(%arg0: i32) -> (i32, i32) {
    %c0_i32 = arith.constant 0 : i32
    %c0_i32_0 = arith.constant 0 : i32
    return %arg0, %c0_i32 : i32, i32
  }
}

</mosaic_0001>

<llo_original>
// kernel: tpu_custom_call.1
$region0: #{tpu_custom_call.1}
  #allocation0 [shape = 'u32[]', space=smem, size = 0x4, offset = 0x4, fixed_abs, tag = 'smem constant byte address 0x4 - core index']
  #allocation1 [shape = 'u32[144,128]{1,0:T(1,128)}', space=vmem, size = 0x12000, scoped, tag = 'internal scratch']
  %s0 = inlined_call_operand.hbm [shape: f32[8,32], index: 0, kind: input, shape index: {}]
  %s1 = inlined_call_operand.vmem [shape: f32[1,32], index: 1, kind: input, shape index: {}]
  %s2 = inlined_call_operand.hbm [shape: f32[8,32], index: 2, kind: output, shape index: {}]
  %s3 = sld [smem:[#allocation0]]
  $region22: #{tpu_custom_call.1} parent=0
    _
  %s5 = ssub.s32 1, %s3
  %s6 = scalar_select 0, %s5, %s3
  $region1: #{tpu_custom_call.1} parent=0
    #allocation2 [shape = 'u8[4096]{0}', space=vmem, size = 0x1000, scoped, tag = 'input window, operand 0, single buffered']
    #allocation3 [shape = 's32[1]{0}', space=sflag, size = 0x4, scoped, tag = 'scoped memory for tpu_custom_call.1']
    #allocation4 [shape = 's32[1]{0}', space=sflag, size = 0x4, scoped, tag = 'scoped memory for tpu_custom_call.1']
    #allocation5 [shape = 'u8[4096]{0}', space=vmem, size = 0x1000, scoped, tag = 'output window, operand 0, single buffered']
    %7 = vsyncpa [#allocation3], 0
    %8 = vsyncpa [#allocation4], 0
    // Predicated region
    $region2: #{tpu_custom_call.1} parent=1 // pred_check
      _
    $region3: #{tpu_custom_call.1} parent=1 // pred_check_branch
      %10 = sbr.rel (0) target = $region5
    $region4: #{tpu_custom_call.1} parent=1 // pred_region
      %s12 = ssub.s32 128, 128
      %13 = vsyncadd [#allocation3], %s12
      %s15 = sshll.u32 [#allocation2], 4
      %s16 = int_to_ptr.vmem [resolvable:$true] %s15
      %18 = dma.hbm_to_vmem [thread:$0]  %s0, 128, %s16, [#allocation3]
    $region5: #{tpu_custom_call.1} parent=1 // pred_fallthru
      _
    // Predicated region
    $region6: #{tpu_custom_call.1} parent=1 // pred_check
      _
    $region7: #{tpu_custom_call.1} parent=1 // pred_check_branch
      %20 = sbr.rel (0) target = $region9
    $region8: #{tpu_custom_call.1} parent=1 // pred_region
      _
    $region9: #{tpu_custom_call.1} parent=1 // pred_fallthru
      _
    // Predicated region
    $region10: #{tpu_custom_call.1} parent=1 // pred_check
      _
    $region11: #{tpu_custom_call.1} parent=1 // pred_check_branch
      %22 = sbr.rel (0) target = $region13
    $region12: #{tpu_custom_call.1} parent=1 // pred_region
      %23 = dma.done [#allocation3], 128
    $region13: #{tpu_custom_call.1} parent=1 // pred_fallthru
      _
    %v24 = vld [vmem:[#allocation2] sm:$0xff]
    %v25 = vld [vmem:[%s1] sm:$0x1]
    %v26 = vmul.f32 %v24, %v24
    %vm27 = vcmask 261120
    %v28 = vsel %vm27, %v26, 0.0
    %29 = vadd.xlane.f32.xlu0 %v28
    %v30 = vpop.xlane.xlu0 %29
    %v31 = vmul.f32 %v30, 0.03125
    %v32 = vadd.f32 %v31, 1.1920929e-07
    %v33 = vrsqrt.pop %v32
    %v34 = vmul.f32 %v24, %v33
    %v36 = vlaneseq
    %v37 = vshrl.u32 %v36, 7
    %v38 = vsub.s32 0, %v37
    %v39 = vrot.slane %v25, %v38
    %v41 = vmul.f32 %v34, %v39
    %42 = vst.msk [vmem:[#allocation5] sm:$0xff] %vm27, %v41
    // Predicated region
    $region14: #{tpu_custom_call.1} parent=1 // pred_check
      _
    $region15: #{tpu_custom_call.1} parent=1 // pred_check_branch
      %44 = sbr.rel (0) target = $region17
    $region16: #{tpu_custom_call.1} parent=1 // pred_region
      %s46 = ssub.s32 128, 128
      %47 = vsyncadd [#allocation4], %s46
      %s49 = sshll.u32 [#allocation5], 4
      %s50 = int_to_ptr.vmem [resolvable:$true] %s49
      %52 = dma.vmem_to_hbm [thread:$0]  %s50, 128, %s2, [#allocation4]
    $region17: #{tpu_custom_call.1} parent=1 // pred_fallthru
      _
    // Predicated region
    $region18: #{tpu_custom_call.1} parent=1 // pred_check
      _
    $region19: #{tpu_custom_call.1} parent=1 // pred_check_branch
      %54 = sbr.rel (0) target = $region21
    $region20: #{tpu_custom_call.1} parent=1 // pred_region
      %55 = dma.done [#allocation4], 128
    $region21: #{tpu_custom_call.1} parent=1 // pred_fallthru
      _
    %56 = vsyncpa [#allocation3], 1
    %57 = vsyncpa [#allocation4], 1

</llo_original>
